<compile_context>
chip_gen: v7x
topology: tpu7x:2x2x1
jax: 0.10.0
libtpu: 0.0.40
codegen_flags: <defaults>
</compile_context>

<pallas_src>
import jax
import jax.numpy as jnp
from jax.experimental import pallas as pl
from jax.experimental.pallas import tpu as pltpu

NEG_SLOPE = 0.01   # nn.LeakyReLU default
BN_EPS = 1e-5      # nn.BatchNorm1d default


def _leaky(x):
    return jnp.where(x >= 0, x, NEG_SLOPE * x)


def res_block_forward(x, params):
    """Forward of ResBlock. x: (N, C, L) float32 (PyTorch Conv1d NCL layout)."""
    N, Cin, L = map(int, x.shape)
    Cmid = int(params["w1"].shape[0])
    assert Cin == Cmid, "ResBlock's 2nd BatchNorm1d(channel) requires in_channel == channel"
    C = Cin
    NL = N * L

    # torch Conv1d weight (out, in, k) -> (out, k*in), k-major so it matches the
    # [x(t-1); x(t); x(t+1)] row-block order of the im2col matrix built in-kernel.
    w1_2d = jnp.transpose(params["w1"], (0, 2, 1)).reshape(Cmid, 3 * Cin).astype(jnp.float32)
    w2_2d = jnp.transpose(params["w2"], (0, 2, 1)).reshape(Cin, 3 * Cmid).astype(jnp.float32)
    # Pack the six per-channel vectors into one (C, 6) array.
    p2d = jnp.stack([params["b1"], params["g1"], params["be1"],
                     params["b2"], params["g2"], params["be2"]],
                    axis=1).astype(jnp.float32)

    inv_cnt = 1.0 / float(NL)

    def kernel(x_ref, w1_ref, w2_ref, p_ref, o_ref):
        # Flatten batches onto the lane axis: (N, C, L) -> (C, N*L).
        x2d = jnp.concatenate([x_ref[n] for n in range(N)], axis=-1)

        p = p_ref[...]                                        # (C, 6)
        b1, g1, be1 = p[:, 0:1], p[:, 1:2], p[:, 2:3]
        b2, g2, be2 = p[:, 3:4], p[:, 4:5], p[:, 5:6]

        zcol = jnp.zeros((C, 1), jnp.float32)

        def conv3(h2d, w_ref, bias):
            # im2col rows = [h(t-1); h(t); h(t+1)] with per-sequence zero padding;
            # columns = fused (batch, position).  One MXU matmul per conv layer
            # covering all taps and all batches.
            # (Boundary handling is a static unroll over N; for large N switch to
            #  a masked-roll formulation.)
            prev_parts, next_parts = [], []
            for n in range(N):
                hn = h2d[:, n * L:(n + 1) * L]
                prev_parts.append(jnp.concatenate([zcol, hn[:, :L - 1]], axis=1))
                next_parts.append(jnp.concatenate([hn[:, 1:], zcol], axis=1))
            prev = jnp.concatenate(prev_parts, axis=1)        # (C, NL)
            nxt = jnp.concatenate(next_parts, axis=1)         # (C, NL)
            im = jnp.concatenate([prev, h2d, nxt], axis=0)    # (3C, NL)
            return jnp.dot(w_ref[...], im,
                           preferred_element_type=jnp.float32) + bias

        def bn(y, g, be):
            # BatchNorm1d training-mode batch stats (biased variance) over
            # (batch, length) == the lane axis, per channel (sublane).
            mean = jnp.sum(y, axis=1, keepdims=True) * inv_cnt
            c = y - mean
            var = jnp.sum(c * c, axis=1, keepdims=True) * inv_cnt
            return c * jax.lax.rsqrt(var + BN_EPS) * g + be

        a = _leaky(x2d)
        h = _leaky(bn(conv3(a, w1_ref, b1), g1, be1))
        y = bn(conv3(h, w2_ref, b2), g2, be2) + x2d           # residual: ORIGINAL input

        # Write back in the native (N, C, L) layout.
        for n in range(N):
            o_ref[n, :, :] = y[:, n * L:(n + 1) * L]

    def full_spec(shape):
        return pl.BlockSpec(shape, lambda i, _nd=len(shape): (0,) * _nd)

    # Whole problem fits comfortably in VMEM at these sizes -> single grid point.
    # (At production sizes: grid over N*L row tiles with "parallel" semantics and a
    #  two-pass BN so v7x can shard the work across its two TensorCores.)
    out = pl.pallas_call(
        kernel,
        out_shape=jax.ShapeDtypeStruct((N, C, L), jnp.float32),
        grid=(1,),
        in_specs=[full_spec((N, C, L)),
                  full_spec((Cmid, 3 * Cin)),
                  full_spec((Cin, 3 * Cmid)),
                  full_spec((C, 6))],
        out_specs=full_spec((N, C, L)),
        compiler_params=pltpu.CompilerParams(dimension_semantics=("arbitrary",)),
    )(x.astype(jnp.float32), w1_2d, w2_2d, p2d)
    return out


def init_params(key, in_channel, channel):
    """Deterministic synthetic init (mirrors typical weights_init: small-normal conv
    weights, zero biases, BN gamma ~ N(1, 0.02), BN beta = 0)."""
    k1, k2, k3, k4 = jax.random.split(key, 4)
    return {
        "w1": 0.1 * jax.random.normal(k1, (channel, in_channel, 3), jnp.float32),
        "b1": jnp.zeros((channel,), jnp.float32),
        "g1": 1.0 + 0.02 * jax.random.normal(k2, (channel,), jnp.float32),
        "be1": jnp.zeros((channel,), jnp.float32),
        "w2": 0.1 * jax.random.normal(k3, (in_channel, channel, 3), jnp.float32),
        "b2": jnp.zeros((in_channel,), jnp.float32),
        "g2": 1.0 + 0.02 * jax.random.normal(k4, (channel,), jnp.float32),
        "be2": jnp.zeros((channel,), jnp.float32),
    }


def ref_forward(x, p):
    """Pure-JAX all-f32 reference with identical semantics (for verification)."""
    def conv1d(v, w, b):
        y = jax.lax.conv_general_dilated(
            v, w, window_strides=(1,), padding=((1, 1),),
            dimension_numbers=("NCH", "OIH", "NCH"),
            precision=jax.lax.Precision.HIGHEST)
        return y + b[None, :, None]

    def bn(v, g, be):
        mean = v.mean(axis=(0, 2), keepdims=True)
        var = ((v - mean) ** 2).mean(axis=(0, 2), keepdims=True)
        return (v - mean) / jnp.sqrt(var + BN_EPS) * g[None, :, None] + be[None, :, None]

    h = _leaky(x)
    h = bn(conv1d(h, p["w1"], p["b1"]), p["g1"], p["be1"])
    h = _leaky(h)
    h = bn(conv1d(h, p["w2"], p["b2"]), p["g2"], p["be2"])
    return h + x


if __name__ == "__main__":
    key = jax.random.PRNGKey(0)
    kx, kp = jax.random.split(key)

    N, C, L = 2, 4, 16          # in_channel == channel == 4 (required by the module's 2nd BN)
    x = jax.random.normal(kx, (N, C, L), jnp.float32)
    params = init_params(kp, C, C)

    out = jax.block_until_ready(res_block_forward(x, params))
    ref = ref_forward(x, params)

    assert out.shape == (N, C, L)
    # DEFAULT matmul precision (per perf review) feeds the MXU bf16-rounded inputs;
    # after two BatchNorm normalizations this gives ~1e-2-level deviation from the
    # all-f32 reference, hence the 3e-2 tolerance (any structural/layout bug would
    # show up as an O(1) error and still be caught).
    max_err = float(jnp.max(jnp.abs(out - ref)))
    assert bool(jnp.allclose(out, ref, atol=3e-2, rtol=3e-2)), max_err

    # TODO(synk): BatchNorm running-mean/var buffer updates (training-mode side
    # effect) are not modeled; they do not affect the forward output.
    print("KERNEL_OK")
</pallas_src>

<mosaic_0001>
module attributes {stable_mosaic.version = 11 : i64} {
  func.func @kernel(%arg0: i32, %arg1: memref<2x4x16xf32, #tpu.memory_space<vmem>>, %arg2: memref<4x12xf32, #tpu.memory_space<vmem>>, %arg3: memref<4x12xf32, #tpu.memory_space<vmem>>, %arg4: memref<4x6xf32, #tpu.memory_space<vmem>>, %arg5: memref<2x4x16xf32, #tpu.memory_space<vmem>>) attributes {dimension_semantics = [#tpu.dimension_semantics<arbitrary>], iteration_bounds = array<i64: 1>, scalar_prefetch = 0 : i64, scratch_operands = 0 : i64, tpu.core_type = #tpu.core_type<tc>, window_params = [{pipeline_mode = #tpu.pipeline_mode<synchronous>, transform_indices = @transform_0, window_bounds = array<i64: 2, 4, 16>}, {pipeline_mode = #tpu.pipeline_mode<synchronous>, transform_indices = @transform_1, window_bounds = array<i64: 4, 12>}, {pipeline_mode = #tpu.pipeline_mode<synchronous>, transform_indices = @transform_2, window_bounds = array<i64: 4, 12>}, {pipeline_mode = #tpu.pipeline_mode<synchronous>, transform_indices = @transform_3, window_bounds = array<i64: 4, 6>}, {pipeline_mode = #tpu.pipeline_mode<synchronous>, transform_indices = @transform_4, window_bounds = array<i64: 2, 4, 16>}]} {
    %c0 = arith.constant 0 : index
    %c0_0 = arith.constant 0 : index
    %c0_1 = arith.constant 0 : index
    %0 = vector.load %arg1[%c0, %c0_0, %c0_1] : memref<2x4x16xf32, #tpu.memory_space<vmem>>, vector<1x4x16xf32>
    %1 = vector.shape_cast %0 : vector<1x4x16xf32> to vector<4x16xf32>
    %c1 = arith.constant 1 : index
    %c0_2 = arith.constant 0 : index
    %c0_3 = arith.constant 0 : index
    %2 = vector.load %arg1[%c1, %c0_2, %c0_3] : memref<2x4x16xf32, #tpu.memory_space<vmem>>, vector<1x4x16xf32>
    %3 = vector.shape_cast %2 : vector<1x4x16xf32> to vector<4x16xf32>
    %4 = tpu.concatenate %1, %3 in 1 : vector<4x16xf32>, vector<4x16xf32> -> vector<4x32xf32>
    %c0_4 = arith.constant 0 : index
    %c0_5 = arith.constant 0 : index
    %5 = vector.load %arg4[%c0_4, %c0_5] : memref<4x6xf32, #tpu.memory_space<vmem>>, vector<4x6xf32>
    %6 = vector.extract_strided_slice %5 {offsets = [0, 0], sizes = [4, 1], strides = [1, 1]} : vector<4x6xf32> to vector<4x1xf32>
    %7 = vector.extract_strided_slice %5 {offsets = [0, 1], sizes = [4, 1], strides = [1, 1]} : vector<4x6xf32> to vector<4x1xf32>
    %8 = vector.extract_strided_slice %5 {offsets = [0, 2], sizes = [4, 1], strides = [1, 1]} : vector<4x6xf32> to vector<4x1xf32>
    %9 = vector.extract_strided_slice %5 {offsets = [0, 3], sizes = [4, 1], strides = [1, 1]} : vector<4x6xf32> to vector<4x1xf32>
    %10 = vector.extract_strided_slice %5 {offsets = [0, 4], sizes = [4, 1], strides = [1, 1]} : vector<4x6xf32> to vector<4x1xf32>
    %11 = vector.extract_strided_slice %5 {offsets = [0, 5], sizes = [4, 1], strides = [1, 1]} : vector<4x6xf32> to vector<4x1xf32>
    %cst = arith.constant 0.000000e+00 : f32
    %12 = vector.broadcast %cst : f32 to vector<4x1xf32>
    %cst_6 = arith.constant 0.000000e+00 : f32
    %13 = vector.broadcast %cst_6 : f32 to vector<4x32xf32>
    %14 = arith.cmpf oge, %4, %13 : vector<4x32xf32>
    %cst_7 = arith.constant 0.00999999977 : f32
    %15 = vector.broadcast %cst_7 : f32 to vector<4x32xf32>
    %16 = arith.mulf %15, %4 : vector<4x32xf32>
    %17 = arith.select %14, %4, %16 : vector<4x32xi1>, vector<4x32xf32>
    %18 = vector.extract_strided_slice %17 {offsets = [0, 0], sizes = [4, 16], strides = [1, 1]} : vector<4x32xf32> to vector<4x16xf32>
    %19 = vector.extract_strided_slice %18 {offsets = [0, 0], sizes = [4, 15], strides = [1, 1]} : vector<4x16xf32> to vector<4x15xf32>
    %20 = tpu.concatenate %12, %19 in 1 : vector<4x1xf32>, vector<4x15xf32> -> vector<4x16xf32>
    %21 = vector.extract_strided_slice %18 {offsets = [0, 1], sizes = [4, 15], strides = [1, 1]} : vector<4x16xf32> to vector<4x15xf32>
    %22 = tpu.concatenate %21, %12 in 1 : vector<4x15xf32>, vector<4x1xf32> -> vector<4x16xf32>
    %23 = vector.extract_strided_slice %17 {offsets = [0, 16], sizes = [4, 16], strides = [1, 1]} : vector<4x32xf32> to vector<4x16xf32>
    %24 = vector.extract_strided_slice %23 {offsets = [0, 0], sizes = [4, 15], strides = [1, 1]} : vector<4x16xf32> to vector<4x15xf32>
    %25 = tpu.concatenate %12, %24 in 1 : vector<4x1xf32>, vector<4x15xf32> -> vector<4x16xf32>
    %26 = vector.extract_strided_slice %23 {offsets = [0, 1], sizes = [4, 15], strides = [1, 1]} : vector<4x16xf32> to vector<4x15xf32>
    %27 = tpu.concatenate %26, %12 in 1 : vector<4x15xf32>, vector<4x1xf32> -> vector<4x16xf32>
    %28 = tpu.concatenate %20, %25 in 1 : vector<4x16xf32>, vector<4x16xf32> -> vector<4x32xf32>
    %29 = tpu.concatenate %22, %27 in 1 : vector<4x16xf32>, vector<4x16xf32> -> vector<4x32xf32>
    %30 = tpu.concatenate %28, %17, %29 in 0 : vector<4x32xf32>, vector<4x32xf32>, vector<4x32xf32> -> vector<12x32xf32>
    %c0_8 = arith.constant 0 : index
    %c0_9 = arith.constant 0 : index
    %31 = vector.load %arg2[%c0_8, %c0_9] : memref<4x12xf32, #tpu.memory_space<vmem>>, vector<4x12xf32>
    %cst_10 = arith.constant dense<0.000000e+00> : vector<4x32xf32>
    %32 = tpu.matmul %31, %30, %cst_10 {dimension_numbers = #tpu.dot_dimension_numbers<[1], [0], [0], [1], [0, 0, 1, 1], [], []>} : vector<4x12xf32>, vector<12x32xf32>, vector<4x32xf32> -> vector<4x32xf32>
    %33 = vector.broadcast %6 : vector<4x1xf32> to vector<4x32xf32>
    %34 = arith.addf %32, %33 : vector<4x32xf32>
    %cst_11 = arith.constant dense<0.000000e+00> : vector<4xf32>
    %35 = vector.multi_reduction <add>, %34, %cst_11 [1] : vector<4x32xf32> to vector<4xf32>
    %36 = vector.shape_cast %35 : vector<4xf32> to vector<4x1xf32>
    %cst_12 = arith.constant 3.125000e-02 : f32
    %37 = vector.broadcast %cst_12 : f32 to vector<4x1xf32>
    %38 = arith.mulf %36, %37 : vector<4x1xf32>
    %39 = vector.broadcast %38 : vector<4x1xf32> to vector<4x32xf32>
    %40 = arith.subf %34, %39 : vector<4x32xf32>
    %41 = arith.mulf %40, %40 : vector<4x32xf32>
    %cst_13 = arith.constant dense<0.000000e+00> : vector<4xf32>
    %42 = vector.multi_reduction <add>, %41, %cst_13 [1] : vector<4x32xf32> to vector<4xf32>
    %43 = vector.shape_cast %42 : vector<4xf32> to vector<4x1xf32>
    %cst_14 = arith.constant 3.125000e-02 : f32
    %44 = vector.broadcast %cst_14 : f32 to vector<4x1xf32>
    %45 = arith.mulf %43, %44 : vector<4x1xf32>
    %cst_15 = arith.constant 9.99999974E-6 : f32
    %46 = vector.broadcast %cst_15 : f32 to vector<4x1xf32>
    %47 = arith.addf %45, %46 : vector<4x1xf32>
    %48 = math.rsqrt %47 : vector<4x1xf32>
    %49 = vector.broadcast %48 : vector<4x1xf32> to vector<4x32xf32>
    %50 = arith.mulf %40, %49 : vector<4x32xf32>
    %51 = vector.broadcast %7 : vector<4x1xf32> to vector<4x32xf32>
    %52 = arith.mulf %50, %51 : vector<4x32xf32>
    %53 = vector.broadcast %8 : vector<4x1xf32> to vector<4x32xf32>
    %54 = arith.addf %52, %53 : vector<4x32xf32>
    %cst_16 = arith.constant 0.000000e+00 : f32
    %55 = vector.broadcast %cst_16 : f32 to vector<4x32xf32>
    %56 = arith.cmpf oge, %54, %55 : vector<4x32xf32>
    %cst_17 = arith.constant 0.00999999977 : f32
    %57 = vector.broadcast %cst_17 : f32 to vector<4x32xf32>
    %58 = arith.mulf %57, %54 : vector<4x32xf32>
    %59 = arith.select %56, %54, %58 : vector<4x32xi1>, vector<4x32xf32>
    %60 = vector.extract_strided_slice %59 {offsets = [0, 0], sizes = [4, 16], strides = [1, 1]} : vector<4x32xf32> to vector<4x16xf32>
    %61 = vector.extract_strided_slice %60 {offsets = [0, 0], sizes = [4, 15], strides = [1, 1]} : vector<4x16xf32> to vector<4x15xf32>
    %62 = tpu.concatenate %12, %61 in 1 : vector<4x1xf32>, vector<4x15xf32> -> vector<4x16xf32>
    %63 = vector.extract_strided_slice %60 {offsets = [0, 1], sizes = [4, 15], strides = [1, 1]} : vector<4x16xf32> to vector<4x15xf32>
    %64 = tpu.concatenate %63, %12 in 1 : vector<4x15xf32>, vector<4x1xf32> -> vector<4x16xf32>
    %65 = vector.extract_strided_slice %59 {offsets = [0, 16], sizes = [4, 16], strides = [1, 1]} : vector<4x32xf32> to vector<4x16xf32>
    %66 = vector.extract_strided_slice %65 {offsets = [0, 0], sizes = [4, 15], strides = [1, 1]} : vector<4x16xf32> to vector<4x15xf32>
    %67 = tpu.concatenate %12, %66 in 1 : vector<4x1xf32>, vector<4x15xf32> -> vector<4x16xf32>
    %68 = vector.extract_strided_slice %65 {offsets = [0, 1], sizes = [4, 15], strides = [1, 1]} : vector<4x16xf32> to vector<4x15xf32>
    %69 = tpu.concatenate %68, %12 in 1 : vector<4x15xf32>, vector<4x1xf32> -> vector<4x16xf32>
    %70 = tpu.concatenate %62, %67 in 1 : vector<4x16xf32>, vector<4x16xf32> -> vector<4x32xf32>
    %71 = tpu.concatenate %64, %69 in 1 : vector<4x16xf32>, vector<4x16xf32> -> vector<4x32xf32>
    %72 = tpu.concatenate %70, %59, %71 in 0 : vector<4x32xf32>, vector<4x32xf32>, vector<4x32xf32> -> vector<12x32xf32>
    %c0_18 = arith.constant 0 : index
    %c0_19 = arith.constant 0 : index
    %73 = vector.load %arg3[%c0_18, %c0_19] : memref<4x12xf32, #tpu.memory_space<vmem>>, vector<4x12xf32>
    %cst_20 = arith.constant dense<0.000000e+00> : vector<4x32xf32>
    %74 = tpu.matmul %73, %72, %cst_20 {dimension_numbers = #tpu.dot_dimension_numbers<[1], [0], [0], [1], [0, 0, 1, 1], [], []>} : vector<4x12xf32>, vector<12x32xf32>, vector<4x32xf32> -> vector<4x32xf32>
    %75 = vector.broadcast %9 : vector<4x1xf32> to vector<4x32xf32>
    %76 = arith.addf %74, %75 : vector<4x32xf32>
    %cst_21 = arith.constant dense<0.000000e+00> : vector<4xf32>
    %77 = vector.multi_reduction <add>, %76, %cst_21 [1] : vector<4x32xf32> to vector<4xf32>
    %78 = vector.shape_cast %77 : vector<4xf32> to vector<4x1xf32>
    %cst_22 = arith.constant 3.125000e-02 : f32
    %79 = vector.broadcast %cst_22 : f32 to vector<4x1xf32>
    %80 = arith.mulf %78, %79 : vector<4x1xf32>
    %81 = vector.broadcast %80 : vector<4x1xf32> to vector<4x32xf32>
    %82 = arith.subf %76, %81 : vector<4x32xf32>
    %83 = arith.mulf %82, %82 : vector<4x32xf32>
    %cst_23 = arith.constant dense<0.000000e+00> : vector<4xf32>
    %84 = vector.multi_reduction <add>, %83, %cst_23 [1] : vector<4x32xf32> to vector<4xf32>
    %85 = vector.shape_cast %84 : vector<4xf32> to vector<4x1xf32>
    %cst_24 = arith.constant 3.125000e-02 : f32
    %86 = vector.broadcast %cst_24 : f32 to vector<4x1xf32>
    %87 = arith.mulf %85, %86 : vector<4x1xf32>
    %cst_25 = arith.constant 9.99999974E-6 : f32
    %88 = vector.broadcast %cst_25 : f32 to vector<4x1xf32>
    %89 = arith.addf %87, %88 : vector<4x1xf32>
    %90 = math.rsqrt %89 : vector<4x1xf32>
    %91 = vector.broadcast %90 : vector<4x1xf32> to vector<4x32xf32>
    %92 = arith.mulf %82, %91 : vector<4x32xf32>
    %93 = vector.broadcast %10 : vector<4x1xf32> to vector<4x32xf32>
    %94 = arith.mulf %92, %93 : vector<4x32xf32>
    %95 = vector.broadcast %11 : vector<4x1xf32> to vector<4x32xf32>
    %96 = arith.addf %94, %95 : vector<4x32xf32>
    %97 = arith.addf %96, %4 : vector<4x32xf32>
    %98 = vector.extract_strided_slice %97 {offsets = [0, 0], sizes = [4, 16], strides = [1, 1]} : vector<4x32xf32> to vector<4x16xf32>
    %c0_26 = arith.constant 0 : index
    %c0_27 = arith.constant 0 : index
    %c0_28 = arith.constant 0 : index
    %99 = vector.load %arg5[%c0_26, %c0_27, %c0_28] : memref<2x4x16xf32, #tpu.memory_space<vmem>>, vector<1x4x16xf32>
    %100 = vector.shape_cast %99 : vector<1x4x16xf32> to vector<4x16xf32>
    %101 = vector.shape_cast %98 : vector<4x16xf32> to vector<1x4x16xf32>
    tpu.vector_store %arg5[%c0_26, %c0_27, %c0_28], %101 {strides = array<i32>} : memref<2x4x16xf32, #tpu.memory_space<vmem>>, vector<1x4x16xf32>,
    %102 = vector.extract_strided_slice %97 {offsets = [0, 16], sizes = [4, 16], strides = [1, 1]} : vector<4x32xf32> to vector<4x16xf32>
    %c1_29 = arith.constant 1 : index
    %c0_30 = arith.constant 0 : index
    %c0_31 = arith.constant 0 : index
    %103 = vector.load %arg5[%c1_29, %c0_30, %c0_31] : memref<2x4x16xf32, #tpu.memory_space<vmem>>, vector<1x4x16xf32>
    %104 = vector.shape_cast %103 : vector<1x4x16xf32> to vector<4x16xf32>
    %105 = vector.shape_cast %102 : vector<4x16xf32> to vector<1x4x16xf32>
    tpu.vector_store %arg5[%c1_29, %c0_30, %c0_31], %105 {strides = array<i32>} : memref<2x4x16xf32, #tpu.memory_space<vmem>>, vector<1x4x16xf32>,
    return
  }
  func.func @transform_0(%arg0: i32) -> (i32, i32, i32) {
    %c0_i32 = arith.constant 0 : i32
    %c0_i32_0 = arith.constant 0 : i32
    %c0_i32_1 = arith.constant 0 : i32
    %c0_i32_2 = arith.constant 0 : i32
    return %c0_i32, %c0_i32_0, %c0_i32_1 : i32, i32, i32
  }
  func.func @transform_1(%arg0: i32) -> (i32, i32) {
    %c0_i32 = arith.constant 0 : i32
    %c0_i32_0 = arith.constant 0 : i32
    %c0_i32_1 = arith.constant 0 : i32
    return %c0_i32, %c0_i32_0 : i32, i32
  }
  func.func @transform_2(%arg0: i32) -> (i32, i32) {
    %c0_i32 = arith.constant 0 : i32
    %c0_i32_0 = arith.constant 0 : i32
    %c0_i32_1 = arith.constant 0 : i32
    return %c0_i32, %c0_i32_0 : i32, i32
  }
  func.func @transform_3(%arg0: i32) -> (i32, i32) {
    %c0_i32 = arith.constant 0 : i32
    %c0_i32_0 = arith.constant 0 : i32
    %c0_i32_1 = arith.constant 0 : i32
    return %c0_i32, %c0_i32_0 : i32, i32
  }
  func.func @transform_4(%arg0: i32) -> (i32, i32, i32) {
    %c0_i32 = arith.constant 0 : i32
    %c0_i32_0 = arith.constant 0 : i32
    %c0_i32_1 = arith.constant 0 : i32
    %c0_i32_2 = arith.constant 0 : i32
    return %c0_i32, %c0_i32_0, %c0_i32_1 : i32, i32, i32
  }
}

</mosaic_0001>

<llo_original>
// kernel: tpu_custom_call.1
$region0: #{tpu_custom_call.1}
  #allocation0 [shape = 'u32[]', space=smem, size = 0x4, offset = 0x4, fixed_abs, tag = 'smem constant byte address 0x4 - core index']
  #allocation1 [shape = 'u32[144,128]{1,0:T(1,128)}', space=vmem, size = 0x12000, scoped, tag = 'internal scratch']
  %s0 = inlined_call_operand.hbm [shape: f32[2,4,16], index: 0, kind: input, shape index: {}]
  %s1 = inlined_call_operand.hbm [shape: f32[4,12], index: 1, kind: input, shape index: {}]
  %s2 = inlined_call_operand.vmem [shape: f32[4,12], index: 2, kind: input, shape index: {}]
  %s3 = inlined_call_operand.vmem [shape: f32[4,6], index: 3, kind: input, shape index: {}]
  %s4 = inlined_call_operand.hbm [shape: f32[2,4,16], index: 4, kind: output, shape index: {}]
  %s5 = sld [smem:[#allocation0]]
  $region34: #{tpu_custom_call.1} parent=0
    _
  %s7 = ssub.s32 1, %s5
  %s8 = scalar_select 0, %s7, %s5
  $region1: #{tpu_custom_call.1} parent=0
    #allocation2 [shape = 'u8[4096]{0}', space=vmem, size = 0x1000, scoped, tag = 'input window, operand 0, single buffered']
    #allocation3 [shape = 's32[1]{0}', space=sflag, size = 0x4, scoped, tag = 'scoped memory for tpu_custom_call.1']
    #allocation4 [shape = 's32[1]{0}', space=sflag, size = 0x4, scoped, tag = 'scoped memory for tpu_custom_call.1']
    #allocation5 [shape = 'u8[2048]{0}', space=vmem, size = 0x800, scoped, tag = 'input window, operand 1, single buffered']
    #allocation6 [shape = 's32[1]{0}', space=sflag, size = 0x4, scoped, tag = 'scoped memory for tpu_custom_call.1']
    #allocation7 [shape = 'u8[4096]{0}', space=vmem, size = 0x1000, scoped, tag = 'output window, operand 0, single buffered']
    %9 = vsyncpa [#allocation3], 0
    %10 = vsyncpa [#allocation6], 0
    %11 = vsyncpa [#allocation4], 0
    // Predicated region
    $region2: #{tpu_custom_call.1} parent=1 // pred_check
      _
    $region3: #{tpu_custom_call.1} parent=1 // pred_check_branch
      %13 = sbr.rel (0) target = $region5
    $region4: #{tpu_custom_call.1} parent=1 // pred_region
      %s15 = ssub.s32 128, 128
      %16 = vsyncadd [#allocation3], %s15
      %s17 = sshll.u32 [#allocation2], 4
      %s18 = int_to_ptr.vmem [resolvable:$true] %s17
      %23 = dma.hbm_to_vmem [thread:$0]  %s0, 128, %s18, [#allocation3], 64, 64, 4
    $region5: #{tpu_custom_call.1} parent=1 // pred_fallthru
      _
    // Predicated region
    $region6: #{tpu_custom_call.1} parent=1 // pred_check
      _
    $region7: #{tpu_custom_call.1} parent=1 // pred_check_branch
      %25 = sbr.rel (0) target = $region9
    $region8: #{tpu_custom_call.1} parent=1 // pred_region
      %s27 = ssub.s32 64, 64
      %28 = vsyncadd [#allocation6], %s27
      %s30 = sshll.u32 [#allocation5], 4
      %s31 = int_to_ptr.vmem [resolvable:$true] %s30
      %33 = dma.hbm_to_vmem [thread:$0]  %s1, 64, %s31, [#allocation6]
    $region9: #{tpu_custom_call.1} parent=1 // pred_fallthru
      _
    // Predicated region
    $region10: #{tpu_custom_call.1} parent=1 // pred_check
      _
    $region11: #{tpu_custom_call.1} parent=1 // pred_check_branch
      %35 = sbr.rel (0) target = $region13
    $region12: #{tpu_custom_call.1} parent=1 // pred_region
      _
    $region13: #{tpu_custom_call.1} parent=1 // pred_fallthru
      _
    // Predicated region
    $region14: #{tpu_custom_call.1} parent=1 // pred_check
      _
    $region15: #{tpu_custom_call.1} parent=1 // pred_check_branch
      %37 = sbr.rel (0) target = $region17
    $region16: #{tpu_custom_call.1} parent=1 // pred_region
      _
    $region17: #{tpu_custom_call.1} parent=1 // pred_fallthru
      _
    // Predicated region
    $region18: #{tpu_custom_call.1} parent=1 // pred_check
      _
    $region19: #{tpu_custom_call.1} parent=1 // pred_check_branch
      %39 = sbr.rel (0) target = $region21
    $region20: #{tpu_custom_call.1} parent=1 // pred_region
      %40 = dma.done [#allocation3], 128
    $region21: #{tpu_custom_call.1} parent=1 // pred_fallthru
      _
    // Predicated region
    $region22: #{tpu_custom_call.1} parent=1 // pred_check
      _
    $region23: #{tpu_custom_call.1} parent=1 // pred_check_branch
      %42 = sbr.rel (0) target = $region25
    $region24: #{tpu_custom_call.1} parent=1 // pred_region
      %43 = dma.done [#allocation6], 64
    $region25: #{tpu_custom_call.1} parent=1 // pred_fallthru
      _
    %v44 = vld [vmem:[#allocation2] sm:$0xf]
    %s45 = scalar_lea.vmem [#allocation2], 4
    %v46 = vld [vmem:[%s45] sm:$0xf]
    %48 = vrot.lane.b32.xlu0 %v46, 16
    %v49 = vpop.permute.xlu0 %48
    %vm51 = vcmask 130048
    %v52 = vsel %vm51, %v44, %v49
    %v53 = vld [vmem:[%s3] sm:$0xf]
    %vm54 = vcmp.ge.f32.partialorder %v52, 0.0
    %v55 = vmul.f32 %v52, 0.01
    %v56 = vsel %vm54, %v52, %v55
    %58 = vrot.lane.b32.xlu0 %v56, 1
    %v59 = vpop.permute.xlu0 %58
    %vm61 = vcmask 7168
    %v62 = vsel %vm61, 0.0, %v59
    %63 = vrot.lane.b32.xlu0 %v56, 127
    %v64 = vpop.permute.xlu0 %63
    %vm66 = vcmask 121856
    %v67 = vsel %vm66, %v64, 0.0
    %68 = vrot.lane.b32.xlu0 %v56, 113
    %v69 = vpop.permute.xlu0 %68
    %v71 = vsel %vm61, 0.0, %v69
    %72 = vrot.lane.b32.xlu0 %v56, 111
    %v73 = vpop.permute.xlu0 %72
    %v75 = vsel %vm66, %v73, 0.0
    %77 = vrot.lane.b32.xlu0 %v71, 16
    %v78 = vpop.permute.xlu0 %77
    %v80 = vsel %vm51, %v62, %v78
    %82 = vrot.lane.b32.xlu0 %v75, 16
    %v83 = vpop.permute.xlu0 %82
    %v85 = vsel %vm51, %v67, %v83
    %v86 = vrot.slane %v56, 4
    %vm88 = vcmask 1043456
    %v89 = vsel %vm88, %v80, %v86
    %v90 = vld [vmem:[#allocation5] sm:$0xf]
    %92 = vset.pattern.permute.xlu0 0
    %93 = vperm.xlu0 %92, %v53
    %v94 = vpop.permute.xlu0 %93
    %vm96 = vcmask 97280
    %v98 = vsel %vm96, %v90, 0
    %v101 = vsel %vm88, %v85, 0
    %103 = vmatprep.subr.mxu0 0.0
    %104 = vmatpush1.msra.mxu0 %v89
    %105 = vmatprep.subr.mxu0 0.0
    %106 = vmatpush1.msra.mxu0 %v101
    %107 = vmatprep.subr.mxu0 0.0
    %108 = vmatpush1.msra.mxu0 0.0
    %109 = vmatprep.subr.mxu0 0.0
    %110 = vmatpush1.msra.mxu0 0.0
    %111 = vmatprep.subr.mxu0 0.0
    %112 = vmatpush1.msra.mxu0 0.0
    %113 = vmatprep.subr.mxu0 0.0
    %114 = vmatpush1.msra.mxu0 0.0
    %115 = vmatprep.subr.mxu0 0.0
    %116 = vmatpush1.msra.mxu0 0.0
    %117 = vmatprep.subr.mxu0 0.0
    %118 = vmatpush1.msra.mxu0 0.0
    %119 = vmatprep.subr.mxu0 0.0
    %120 = vmatpush1.msra.mxu0 0.0
    %121 = vmatprep.subr.mxu0 0.0
    %122 = vmatpush1.msra.mxu0 0.0
    %123 = vmatprep.subr.mxu0 0.0
    %124 = vmatpush1.msra.mxu0 0.0
    %125 = vmatprep.subr.mxu0 0.0
    %126 = vmatpush1.msra.mxu0 0.0
    %127 = vmatprep.subr.mxu0 0.0
    %128 = vmatpush1.msra.mxu0 0.0
    %129 = vmatprep.subr.mxu0 0.0
    %130 = vmatpush1.msra.mxu0 0.0
    %131 = vmatprep.subr.mxu0 0.0
    %132 = vmatpush1.msra.mxu0 0.0
    %133 = vmatprep.subr.mxu0 0.0
    %134 = vmatpush1.msra.mxu0 0.0
    %135 = vmatprep.subr.mxu0 0.0
    %136 = vmatpush1.msra.mxu0 0.0
    %137 = vmatprep.subr.mxu0 0.0
    %138 = vmatpush1.msra.mxu0 0.0
    %139 = vmatprep.subr.mxu0 0.0
    %140 = vmatpush1.msra.mxu0 0.0
    %141 = vmatprep.subr.mxu0 0.0
    %142 = vmatpush1.msra.mxu0 0.0
    %143 = vmatprep.subr.mxu0 0.0
    %144 = vmatpush1.msra.mxu0 0.0
    %145 = vmatprep.subr.mxu0 0.0
    %146 = vmatpush1.msra.mxu0 0.0
    %147 = vmatprep.subr.mxu0 0.0
    %148 = vmatpush1.msra.mxu0 0.0
    %149 = vmatprep.subr.mxu0 0.0
    %150 = vmatpush1.msra.mxu0 0.0
    %151 = vmatprep.subr.mxu0 0.0
    %152 = vmatpush1.msra.mxu0 0.0
    %153 = vmatprep.subr.mxu0 0.0
    %154 = vmatpush1.msra.mxu0 0.0
    %155 = vmatprep.subr.mxu0 0.0
    %156 = vmatpush1.msra.mxu0 0.0
    %157 = vmatprep.subr.mxu0 0.0
    %158 = vmatpush1.msra.mxu0 0.0
    %159 = vmatprep.subr.mxu0 0.0
    %160 = vmatpush1.msra.mxu0 0.0
    %161 = vmatprep.subr.mxu0 0.0
    %162 = vmatpush1.msra.mxu0 0.0
    %163 = vmatprep.subr.mxu0 0.0
    %164 = vmatpush1.msra.mxu0 0.0
    %165 = vmatprep.subr.mxu0 0.0
    %166 = vmatpush1.msra.mxu0 0.0
    %167 = vmatprep.mubr.f32.mxu0 0.0
    %168 = vmatmul.mubr.f32.gmra.mrb[0].mxu0 %v98
    %v169 = vpop.f32.mrb[0].mxu0
    %v170 = vadd.f32 %v94, %v169
    %v171 = vpop.f32.mrb[0].mxu0
    %172 = vdwg.mxu0
    %vm173 = vcmask 257024
    %v174 = vsel %vm173, %v170, 0.0
    %175 = vadd.xlane.f32.xlu0 %v174
    %v176 = vpop.xlane.xlu0 %175
    %v177 = vmul.f32 %v176, 0.03125
    %v178 = vsub.f32 %v170, %v177
    %v179 = vmul.f32 %v178, %v178
    %v180 = vsel %vm173, %v179, 0.0
    %181 = vadd.xlane.f32.xlu0 %v180
    %v182 = vpop.xlane.xlu0 %181
    %v183 = vmul.f32 %v182, 0.03125
    %v184 = vadd.f32 %v183, 1e-05
    %v185 = vrsqrt.pop %v184
    %v186 = vmul.f32 %v178, %v185
    %187 = vset.pattern.permute.xlu0 1
    %188 = vperm.xlu0 %187, %v53
    %v189 = vpop.permute.xlu0 %188
    %v191 = vmul.f32 %v186, %v189
    %192 = vset.pattern.permute.xlu0 2
    %193 = vperm.xlu0 %192, %v53
    %v194 = vpop.permute.xlu0 %193
    %v196 = vadd.f32 %v191, %v194
    %vm197 = vcmp.ge.f32.partialorder %v196, 0.0
    %v198 = vmul.f32 %v196, 0.01
    %v199 = vsel %vm197, %v196, %v198
    %201 = vrot.lane.b32.xlu0 %v199, 1
    %v202 = vpop.permute.xlu0 %201
    %v204 = vsel %vm61, 0.0, %v202
    %205 = vrot.lane.b32.xlu0 %v199, 127
    %v206 = vpop.permute.xlu0 %205
    %v208 = vsel %vm66, %v206, 0.0
    %209 = vrot.lane.b32.xlu0 %v199, 113
    %v210 = vpop.permute.xlu0 %209
    %v212 = vsel %vm61, 0.0, %v210
    %213 = vrot.lane.b32.xlu0 %v199, 111
    %v214 = vpop.permute.xlu0 %213
    %v216 = vsel %vm66, %v214, 0.0
    %218 = vrot.lane.b32.xlu0 %v212, 16
    %v219 = vpop.permute.xlu0 %218
    %v221 = vsel %vm51, %v204, %v219
    %223 = vrot.lane.b32.xlu0 %v216, 16
    %v224 = vpop.permute.xlu0 %223
    %v226 = vsel %vm51, %v208, %v224
    %v227 = vrot.slane %v199, 4
    %v229 = vsel %vm88, %v221, %v227
    %v230 = vld [vmem:[%s2] sm:$0xf]
    %231 = vset.pattern.permute.xlu0 3
    %232 = vperm.xlu0 %231, %v53
    %v233 = vpop.permute.xlu0 %232
    %v236 = vsel %vm96, %v230, 0
    %v239 = vsel %vm88, %v226, 0
    %241 = vmatprep.subr.mxu0 0.0
    %242 = vmatpush1.msra.mxu0 %v229
    %243 = vmatprep.subr.mxu0 0.0
    %244 = vmatpush1.msra.mxu0 %v239
    %245 = vmatprep.subr.mxu0 0.0
    %246 = vmatpush1.msra.mxu0 0.0
    %247 = vmatprep.subr.mxu0 0.0
    %248 = vmatpush1.msra.mxu0 0.0
    %249 = vmatprep.subr.mxu0 0.0
    %250 = vmatpush1.msra.mxu0 0.0
    %251 = vmatprep.subr.mxu0 0.0
    %252 = vmatpush1.msra.mxu0 0.0
    %253 = vmatprep.subr.mxu0 0.0
    %254 = vmatpush1.msra.mxu0 0.0
    %255 = vmatprep.subr.mxu0 0.0
    %256 = vmatpush1.msra.mxu0 0.0
    %257 = vmatprep.subr.mxu0 0.0
    %258 = vmatpush1.msra.mxu0 0.0
    %259 = vmatprep.subr.mxu0 0.0
    %260 = vmatpush1.msra.mxu0 0.0
    %261 = vmatprep.subr.mxu0 0.0
    %262 = vmatpush1.msra.mxu0 0.0
    %263 = vmatprep.subr.mxu0 0.0
    %264 = vmatpush1.msra.mxu0 0.0
    %265 = vmatprep.subr.mxu0 0.0
    %266 = vmatpush1.msra.mxu0 0.0
    %267 = vmatprep.subr.mxu0 0.0
    %268 = vmatpush1.msra.mxu0 0.0
    %269 = vmatprep.subr.mxu0 0.0
    %270 = vmatpush1.msra.mxu0 0.0
    %271 = vmatprep.subr.mxu0 0.0
    %272 = vmatpush1.msra.mxu0 0.0
    %273 = vmatprep.subr.mxu0 0.0
    %274 = vmatpush1.msra.mxu0 0.0
    %275 = vmatprep.subr.mxu0 0.0
    %276 = vmatpush1.msra.mxu0 0.0
    %277 = vmatprep.subr.mxu0 0.0
    %278 = vmatpush1.msra.mxu0 0.0
    %279 = vmatprep.subr.mxu0 0.0
    %280 = vmatpush1.msra.mxu0 0.0
    %281 = vmatprep.subr.mxu0 0.0
    %282 = vmatpush1.msra.mxu0 0.0
    %283 = vmatprep.subr.mxu0 0.0
    %284 = vmatpush1.msra.mxu0 0.0
    %285 = vmatprep.subr.mxu0 0.0
    %286 = vmatpush1.msra.mxu0 0.0
    %287 = vmatprep.subr.mxu0 0.0
    %288 = vmatpush1.msra.mxu0 0.0
    %289 = vmatprep.subr.mxu0 0.0
    %290 = vmatpush1.msra.mxu0 0.0
    %291 = vmatprep.subr.mxu0 0.0
    %292 = vmatpush1.msra.mxu0 0.0
    %293 = vmatprep.subr.mxu0 0.0
    %294 = vmatpush1.msra.mxu0 0.0
    %295 = vmatprep.subr.mxu0 0.0
    %296 = vmatpush1.msra.mxu0 0.0
    %297 = vmatprep.subr.mxu0 0.0
    %298 = vmatpush1.msra.mxu0 0.0
    %299 = vmatprep.subr.mxu0 0.0
    %300 = vmatpush1.msra.mxu0 0.0
    %301 = vmatprep.subr.mxu0 0.0
    %302 = vmatpush1.msra.mxu0 0.0
    %303 = vmatprep.subr.mxu0 0.0
    %304 = vmatpush1.msra.mxu0 0.0
    %305 = vmatprep.mubr.f32.mxu0 0.0
    %306 = vmatmul.mubr.f32.gmra.mrb[0].mxu0 %v236
    %v307 = vpop.f32.mrb[0].mxu0
    %v308 = vadd.f32 %v233, %v307
    %v309 = vpop.f32.mrb[0].mxu0
    %310 = vdwg.mxu0
    %v311 = vsel %vm173, %v308, 0.0
    %312 = vadd.xlane.f32.xlu0 %v311
    %v313 = vpop.xlane.xlu0 %312
    %v314 = vmul.f32 %v313, 0.03125
    %v315 = vsub.f32 %v308, %v314
    %v316 = vmul.f32 %v315, %v315
    %v317 = vsel %vm173, %v316, 0.0
    %318 = vadd.xlane.f32.xlu0 %v317
    %v319 = vpop.xlane.xlu0 %318
    %v320 = vmul.f32 %v319, 0.03125
    %v321 = vadd.f32 %v320, 1e-05
    %v322 = vrsqrt.pop %v321
    %v323 = vmul.f32 %v315, %v322
    %324 = vset.pattern.permute.xlu0 4
    %325 = vperm.xlu0 %324, %v53
    %v326 = vpop.permute.xlu0 %325
    %v328 = vmul.f32 %v323, %v326
    %329 = vset.pattern.permute.xlu0 5
    %330 = vperm.xlu0 %329, %v53
    %v331 = vpop.permute.xlu0 %330
    %v333 = vadd.f32 %v328, %v331
    %v334 = vadd.f32 %v333, %v52
    %vm335 = vcmask 125952
    %336 = vst.msk [vmem:[#allocation7] sm:$0xf] %vm335, %v334
    %338 = vrot.lane.b32.xlu0 %v334, 112
    %v339 = vpop.permute.xlu0 %338
    %s341 = scalar_lea.vmem [#allocation7], 4
    %342 = vst.msk [vmem:[%s341] sm:$0xf] %vm335, %v339
    // Predicated region
    $region26: #{tpu_custom_call.1} parent=1 // pred_check
      _
    $region27: #{tpu_custom_call.1} parent=1 // pred_check_branch
      %344 = sbr.rel (0) target = $region29
    $region28: #{tpu_custom_call.1} parent=1 // pred_region
      %s346 = ssub.s32 128, 128
      %347 = vsyncadd [#allocation4], %s346
      %s348 = sshll.u32 [#allocation7], 4
      %s349 = int_to_ptr.vmem [resolvable:$true] %s348
      %354 = dma.vmem_to_hbm [thread:$0]  %s349, 128, %s4, [#allocation4], 64, 64, 4
    $region29: #{tpu_custom_call.1} parent=1 // pred_fallthru
      _
    // Predicated region
    $region30: #{tpu_custom_call.1} parent=1 // pred_check
      _
    $region31: #{tpu_custom_call.1} parent=1 // pred_check_branch
      %356 = sbr.rel (0) target = $region33
    $region32: #{tpu_custom_call.1} parent=1 // pred_region
      %357 = dma.done [#allocation4], 128
    $region33: #{tpu_custom_call.1} parent=1 // pred_fallthru
      _
    %358 = vsyncpa [#allocation3], 1
    %359 = vsyncpa [#allocation6], 1
    %360 = vsyncpa [#allocation4], 1

</llo_original>
